<compile_context>
chip_gen: v5e
topology: v5e:2x2
jax: 0.10.0
libtpu: 0.0.40
codegen_flags: <defaults>
</compile_context>

<pallas_src>
import functools

import numpy as np
import jax
import jax.numpy as jnp
from jax import lax
from jax.experimental import pallas as pl
from jax.experimental.pallas import tpu as pltpu


def _i32(u):
    """uint32 literal -> equivalent int32 value (two's-complement wrap)."""
    u &= 0xFFFFFFFF
    return np.int32(u - (1 << 32) if u >= (1 << 31) else u)


_MIX1 = _i32(0x85EBCA6B)   # murmur3 fmix32 constants
_MIX2 = _i32(0xC2B2AE35)
_GOLD = _i32(0x9E3779B9)


def _pos_encoding_kernel(seed_ref, x_ref, pe_ref, o_ref, *,
                         batch, dropout_p, apply_dropout):
    # x_ref/o_ref: (tile_s, B*D) lane-dense rows.  pe_ref: (tile_s, D).
    pe = pe_ref[...]
    if batch > 1:
        # Row s of x is [b=0: d0..D-1 | b=1: d0..D-1 | ...]; PE depends only on s,
        # so tiling pe along the lane axis reproduces the (S, 1, D) broadcast add.
        pe = jnp.concatenate([pe] * batch, axis=-1)          # (tile_s, B*D)
    y = x_ref[...].astype(jnp.float32) + pe

    if apply_dropout and dropout_p > 0.0:
        rows, cols = y.shape
        # Counter-based hash: unique per-element index -> murmur3 finalizer.
        r = lax.broadcasted_iota(jnp.int32, (rows, cols), 0)
        c = lax.broadcasted_iota(jnp.int32, (rows, cols), 1)
        h = (pl.program_id(0) * rows + r) * cols + c
        h = h ^ (seed_ref[0] * _GOLD)
        h = h ^ lax.shift_right_logical(h, 16)
        h = h * _MIX1
        h = h ^ lax.shift_right_logical(h, 13)
        h = h * _MIX2
        h = h ^ lax.shift_right_logical(h, 16)
        u24 = lax.shift_right_logical(h, 8)                  # uniform in [0, 2^24)
        thresh = int(min(round(dropout_p * (1 << 24)), (1 << 24) - 1))
        keep = u24 >= jnp.int32(thresh)                      # P(keep) = 1 - p
        scale = jnp.float32(1.0 / (1.0 - dropout_p))
        y = jnp.where(keep, y * scale, jnp.float32(0.0))

    o_ref[...] = y.astype(o_ref.dtype)


def make_pos_encoding(max_len, dim_model, dtype=jnp.float32):
    """Deterministic sinusoidal buffer, identical to the PyTorch __init__."""
    pe = np.zeros((max_len, dim_model), dtype=np.float32)
    positions = np.arange(0, max_len, dtype=np.float32).reshape(-1, 1)
    division_term = np.exp(
        np.arange(0, dim_model, 2, dtype=np.float32) * (-np.log(10000.0) / dim_model)
    )
    pe[:, 0::2] = np.sin(positions * division_term)
    pe[:, 1::2] = np.cos(positions * division_term)
    pe = pe[:, None, :]  # (max_len, 1, dim_model) == unsqueeze(0).transpose(0, 1)
    return jnp.asarray(pe, dtype=dtype)


def _choose_tile_s(seq_len, per_row_bytes, budget_bytes=4 << 20):
    """Largest multiple-of-8 divisor of seq_len whose block fits the VMEM budget."""
    fitting = None
    smallest_div = None
    t = 8
    while t <= seq_len:
        if seq_len % t == 0:
            if smallest_div is None:
                smallest_div = t
            if t * per_row_bytes <= budget_bytes:
                fitting = t          # loop ascends -> ends with largest fitting
        t += 8
    if fitting is not None:
        return fitting
    if smallest_div is not None:
        return smallest_div
    return seq_len                   # tiny / awkward seq_len: single full block


def positional_encoding_forward(x, pos_encoding, *, dropout_p, training=False,
                                seed=0, tile_s=None):
    """x: (seq_len, batch, dim_model); pos_encoding: (max_len, 1, dim_model) or (max_len, dim_model)."""
    S, B, D = x.shape
    pe = pos_encoding.reshape(pos_encoding.shape[0], pos_encoding.shape[-1]) \
        if pos_encoding.ndim == 3 else pos_encoding
    max_len = pe.shape[0]
    assert S <= max_len, "sequence length exceeds positional-encoding max_len"
    assert pe.shape[1] == D, "dim_model mismatch between x and pos_encoding"
    if training:
        assert 0.0 <= float(dropout_p) < 1.0, "dropout_p must be in [0, 1) for training"

    itemsize = x.dtype.itemsize
    # bytes per sublane row held in VMEM: x block + out block + pe block
    per_row_bytes = B * D * (itemsize + itemsize) + D * 4
    if tile_s is None:
        tile_s = _choose_tile_s(S, per_row_bytes)
    assert S % tile_s == 0, "tile_s must divide seq_len"
    assert tile_s % 8 == 0 or tile_s == S, "tile_s must be a multiple of 8 (or the full seq)"
    grid = (S // tile_s,)

    # Degenerate fallback: single block whose first dim is not a multiple of 8 —
    # slice PE so its single block spans the full (sliced) array (valid layout).
    if tile_s == S and (S % 8 != 0) and (S != max_len):
        pe = pe[:S]

    x2 = x.reshape(S, B * D)   # free row-major view; lane-dense blocks

    kernel = functools.partial(
        _pos_encoding_kernel,
        batch=B,
        dropout_p=float(dropout_p),
        apply_dropout=bool(training),
    )
    seed_arr = jnp.asarray([seed], dtype=jnp.int32)

    out2 = pl.pallas_call(
        kernel,
        out_shape=jax.ShapeDtypeStruct((S, B * D), x.dtype),
        grid_spec=pltpu.PrefetchScalarGridSpec(
            num_scalar_prefetch=1,              # dropout seed lives in SMEM
            grid=grid,
            in_specs=[
                pl.BlockSpec((tile_s, B * D), lambda i, seed: (i, 0)),
                pl.BlockSpec((tile_s, D), lambda i, seed: (i, 0)),
            ],
            out_specs=pl.BlockSpec((tile_s, B * D), lambda i, seed: (i, 0)),
        ),
        compiler_params=pltpu.CompilerParams(
            dimension_semantics=("parallel",),          # v7x: shard seq blocks over 2 TCs
            vmem_limit_bytes=32 * 1024 * 1024,          # safe on v5e/v6e/v7x
        ),
    )(seed_arr, x2, pe)
    return out2.reshape(S, B, D)


if __name__ == "__main__":
    seq_len, batch, dim_model, max_len = 8, 2, 32, 64
    dropout_p = 0.1

    key = jax.random.PRNGKey(0)
    x = jax.random.normal(key, (seq_len, batch, dim_model), dtype=jnp.float32)
    pe = make_pos_encoding(max_len, dim_model)

    ref = x + pe[:seq_len]   # (S,1,D) broadcast over batch, same as PyTorch

    # Eval mode (dropout == identity): deterministic, check against pure-JAX reference.
    out = positional_encoding_forward(x, pe, dropout_p=dropout_p, training=False)
    out = jax.block_until_ready(out)
    assert out.shape == (seq_len, batch, dim_model)
    assert jnp.allclose(out, ref, atol=1e-6, rtol=1e-6), "mismatch vs reference"

    # Training mode: in-kernel dropout. Every element must be either exactly
    # dropped (0) or the reference value scaled by 1/(1-p).
    out_tr = positional_encoding_forward(
        x, pe, dropout_p=dropout_p, training=True, seed=123
    )
    out_tr = jax.block_until_ready(out_tr)
    scale = 1.0 / (1.0 - dropout_p)
    is_zero = jnp.abs(out_tr) <= 1e-6
    is_scaled = jnp.abs(out_tr - ref * scale) <= 1e-4
    assert out_tr.shape == ref.shape
    assert bool(jnp.all(is_zero | is_scaled)), "dropout output structure mismatch"
    assert bool(jnp.all(jnp.isfinite(out_tr)))

    print("KERNEL_OK")
</pallas_src>

<mosaic_0001>
module attributes {stable_mosaic.version = 11 : i64} {
  func.func @_pos_encoding_kernel(%arg0: i32, %arg1: memref<1xi32, #tpu.memory_space<smem>>, %arg2: memref<8x64xf32, #tpu.memory_space<vmem>>, %arg3: memref<8x32xf32, #tpu.memory_space<vmem>>, %arg4: memref<8x64xf32, #tpu.memory_space<vmem>>) attributes {dimension_semantics = [#tpu.dimension_semantics<parallel>], iteration_bounds = array<i64: 1>, scalar_prefetch = 1 : i64, scratch_operands = 0 : i64, tpu.core_type = #tpu.core_type<tc>, window_params = [{transform_indices = @transform_0, window_bounds = array<i64: 8, 64>}, {transform_indices = @transform_1, window_bounds = array<i64: 8, 32>}, {transform_indices = @transform_2, window_bounds = array<i64: 8, 64>}]} {
    %c0 = arith.constant 0 : index
    %c0_0 = arith.constant 0 : index
    %0 = vector.load %arg3[%c0, %c0_0] : memref<8x32xf32, #tpu.memory_space<vmem>>, vector<8x32xf32>
    %1 = tpu.concatenate %0, %0 in 1 : vector<8x32xf32>, vector<8x32xf32> -> vector<8x64xf32>
    %c0_1 = arith.constant 0 : index
    %c0_2 = arith.constant 0 : index
    %2 = vector.load %arg2[%c0_1, %c0_2] : memref<8x64xf32, #tpu.memory_space<vmem>>, vector<8x64xf32>
    %3 = arith.addf %2, %1 : vector<8x64xf32>
    %c0_3 = arith.constant 0 : index
    %c0_4 = arith.constant 0 : index
    %4 = vector.load %arg4[%c0_3, %c0_4] : memref<8x64xf32, #tpu.memory_space<vmem>>, vector<8x64xf32>
    tpu.vector_store %arg4[%c0_3, %c0_4], %3 {strides = array<i32>} : memref<8x64xf32, #tpu.memory_space<vmem>>, vector<8x64xf32>,
    return
  }
  func.func @transform_0(%arg0: i32, %arg1: memref<1xi32, #tpu.memory_space<smem>>) -> (i32, i32) {
    %c0_i32 = arith.constant 0 : i32
    %c0_i32_0 = arith.constant 0 : i32
    return %arg0, %c0_i32 : i32, i32
  }
  func.func @transform_1(%arg0: i32, %arg1: memref<1xi32, #tpu.memory_space<smem>>) -> (i32, i32) {
    %c0_i32 = arith.constant 0 : i32
    %c0_i32_0 = arith.constant 0 : i32
    return %arg0, %c0_i32 : i32, i32
  }
  func.func @transform_2(%arg0: i32, %arg1: memref<1xi32, #tpu.memory_space<smem>>) -> (i32, i32) {
    %c0_i32 = arith.constant 0 : i32
    %c0_i32_0 = arith.constant 0 : i32
    return %arg0, %c0_i32 : i32, i32
  }
}

</mosaic_0001>

<llo_original>
// kernel: tpu_custom_call.1
$region0: #{tpu_custom_call.1}
  #allocation0 [shape = 'u32[]', space=smem, size = 0x4, offset = 0x4, fixed_abs, tag = 'smem constant byte address 0x4 - core index']
  #allocation1 [shape = 'u32[72,128]{1,0:T(1,128)}', space=vmem, size = 0x9000, scoped, tag = 'internal scratch']
  #allocation2 [shape = 's32[1]{0}', space=sflag, size = 0x4, scoped, tag = 'scoped memory for tpu_custom_call.1']
  #allocation3 [shape = 's32[1]{0:T(128)S(6)}', space=smem, size = 0x200, scoped, tag = 'prefetched SMEM operand 0']
  %s0 = inlined_call_operand.<no memory space> [shape: s32[1], index: 0, kind: input, shape index: {}]
  %s1 = inlined_call_operand.vmem [shape: f32[8,64], index: 1, kind: input, shape index: {}]
  %s2 = inlined_call_operand.vmem [shape: f32[64,32], index: 2, kind: input, shape index: {}]
  %s3 = inlined_call_operand.hbm [shape: f32[8,64], index: 3, kind: output, shape index: {}]
  %s4 = sld [smem:[#allocation0]]
  $region18: #{tpu_custom_call.1} parent=0
    _
  %s6 = ssub.s32 1, %s4
  %s7 = scalar_select 0, %s6, %s4
  %8 = sst [smem:[#allocation3]] %s0
  $region1: #{tpu_custom_call.1} parent=0
    #allocation4 [shape = 'u8[4096]{0}', space=vmem, size = 0x1000, scoped, tag = 'output window, operand 0, single buffered']
    #allocation5 [shape = 's32[1]{0}', space=sflag, size = 0x4, scoped, tag = 'scoped memory for tpu_custom_call.1']
    %9 = vsyncpa [#allocation5], 0
    // Predicated region
    $region2: #{tpu_custom_call.1} parent=1 // pred_check
      _
    $region3: #{tpu_custom_call.1} parent=1 // pred_check_branch
      %11 = sbr.rel (0) target = $region5
    $region4: #{tpu_custom_call.1} parent=1 // pred_region
      _
    $region5: #{tpu_custom_call.1} parent=1 // pred_fallthru
      _
    // Predicated region
    $region6: #{tpu_custom_call.1} parent=1 // pred_check
      _
    $region7: #{tpu_custom_call.1} parent=1 // pred_check_branch
      %13 = sbr.rel (0) target = $region9
    $region8: #{tpu_custom_call.1} parent=1 // pred_region
      _
    $region9: #{tpu_custom_call.1} parent=1 // pred_fallthru
      _
    %v14 = vld [vmem:[%s2] sm:$0xff]
    %16 = vrot.lane.b32.xlu0 %v14, 32
    %v17 = vpop.permute.xlu0 %16
    %vm19 = vcmask 261120
    %v20 = vsel %vm19, %v14, %v17
    %v21 = vld [vmem:[%s1] sm:$0xff]
    %v22 = vadd.f32 %v21, %v20
    %vm23 = vcmask 523264
    %24 = vst.msk [vmem:[#allocation4] sm:$0xff] %vm23, %v22
    // Predicated region
    $region10: #{tpu_custom_call.1} parent=1 // pred_check
      _
    $region11: #{tpu_custom_call.1} parent=1 // pred_check_branch
      %26 = sbr.rel (0) target = $region13
    $region12: #{tpu_custom_call.1} parent=1 // pred_region
      %28 = vsyncadd [#allocation5], 0
      %s30 = sshll.u32 [#allocation4], 4
      %s31 = int_to_ptr.vmem [resolvable:$true] %s30
      %s32 = sshll.u32 %s3, 4
      %s33 = int_to_ptr.hbm [resolvable:$true] %s32
      %35 = dma.vmem_to_hbm [thread:$0]  %s31, 128, %s33, [#allocation5]
    $region13: #{tpu_custom_call.1} parent=1 // pred_fallthru
      _
    // Predicated region
    $region14: #{tpu_custom_call.1} parent=1 // pred_check
      _
    $region15: #{tpu_custom_call.1} parent=1 // pred_check_branch
      %37 = sbr.rel (0) target = $region17
    $region16: #{tpu_custom_call.1} parent=1 // pred_region
      %39 = dma.done [#allocation5], 128
    $region17: #{tpu_custom_call.1} parent=1 // pred_fallthru
      _
    %40 = vsyncpa [#allocation5], 1

</llo_original>
